<compile_context>
chip_gen: v7x
topology: tpu7x:2x2x1
jax: 0.10.0
libtpu: 0.0.40
codegen_flags: <defaults>
</compile_context>

<pallas_src>
import functools

import jax
import jax.numpy as jnp
import numpy as np
from jax.experimental import pallas as pl
from jax.experimental.pallas import tpu as pltpu

NEG_INF = -1e9


def _pick_tile(dim, cap):
    """Largest power-of-two tile <= cap that divides dim, else the full dim."""
    t = cap
    while t >= 8:
        if dim % t == 0:
            return t
        t //= 2
    return dim


# ----------------------------------------------------------------------------
# Tiled linear kernel: y = x @ W + b  (bf16 MXU inputs, f32 accumulation)
# ----------------------------------------------------------------------------
def _linear_kernel(x_ref, w_ref, b_ref, o_ref, acc_ref):
    @pl.when(pl.program_id(2) == 0)
    def _():
        acc_ref[...] = jnp.zeros_like(acc_ref)

    acc_ref[...] += jnp.dot(
        x_ref[...].astype(jnp.bfloat16),
        w_ref[...].astype(jnp.bfloat16),
        preferred_element_type=jnp.float32)

    @pl.when(pl.program_id(2) == pl.num_programs(2) - 1)
    def _():
        o_ref[...] = (acc_ref[...] + b_ref[...]).astype(o_ref.dtype)


def pallas_linear(x, w, b, out_dtype=jnp.float32):
    """x: (M, Din), w: (Din, Dout) f32, b: (1, Dout) f32 -> (M, Dout)."""
    M, Din = x.shape
    Dout = w.shape[1]
    tm = _pick_tile(M, 256)
    tn = _pick_tile(Dout, 256)
    tk = _pick_tile(Din, 512)
    grid = (M // tm, Dout // tn, Din // tk)
    return pl.pallas_call(
        _linear_kernel,
        out_shape=jax.ShapeDtypeStruct((M, Dout), out_dtype),
        grid_spec=pltpu.PrefetchScalarGridSpec(
            num_scalar_prefetch=0,
            grid=grid,
            in_specs=[
                pl.BlockSpec((tm, tk), lambda i, j, k: (i, k)),
                pl.BlockSpec((tk, tn), lambda i, j, k: (k, j)),
                pl.BlockSpec((1, tn), lambda i, j, k: (0, j)),
            ],
            out_specs=pl.BlockSpec((tm, tn), lambda i, j, k: (i, j)),
            scratch_shapes=[pltpu.VMEM((tm, tn), jnp.float32)],
        ),
        compiler_params=pltpu.CompilerParams(
            dimension_semantics=("parallel", "parallel", "arbitrary"),
            vmem_limit_bytes=48 * 1024 * 1024),
    )(x, w, b)


# ----------------------------------------------------------------------------
# Flash-style attention kernel (rotary + causal + key-length mask, online
# softmax, heads folded inside the kernel, lane-dense (tl, H*Dv) output).
# ----------------------------------------------------------------------------
def _rotated(x, half):
    """roll(x, half) along the lane axis == concat([x2, x1])."""
    if (2 * half) % 128 == 0:
        return pltpu.roll(x, half, axis=-1)          # XLU slot, free-ish
    return jnp.concatenate([x[:, half:], x[:, :half]], axis=-1)


def _attention_kernel(keylen_ref,                       # scalar prefetch (SMEM)
                      q_ref, k_ref, v_ref,
                      cos_q_ref, sin_q_ref, cos_k_ref, sin_k_ref,
                      o_ref,
                      m_scr, l_scr, acc_scr, *, H, E, Dv):
    n = pl.program_id(0)
    li = pl.program_id(1)
    si = pl.program_id(2)
    tl = q_ref.shape[1]
    ts = k_ref.shape[1]

    @pl.when(si == 0)
    def _():
        m_scr[...] = jnp.full_like(m_scr, -jnp.inf)
        l_scr[...] = jnp.zeros_like(l_scr)
        acc_scr[...] = jnp.zeros_like(acc_scr)

    # Causal + key-length mask for this (tl, ts) tile, built from iota + the
    # prefetched int32 key lengths (no f32 mask DMA).
    q_pos = li * tl + jax.lax.broadcasted_iota(jnp.int32, (tl, ts), 0)
    k_pos = si * ts + jax.lax.broadcasted_iota(jnp.int32, (tl, ts), 1)
    keep = (k_pos <= q_pos) & (k_pos < keylen_ref[n])
    bias = jnp.where(keep, 0.0, NEG_INF).astype(jnp.float32)
    # TODO(synk): fully-masked KV tiles could be skipped with pl.when once
    # key_len == 0 rows are excluded; kept unconditional to match reference.

    cos_q = cos_q_ref[...]
    sin_q = sin_q_ref[...]          # sign-folded: concat(-sin_lo, sin_hi)
    cos_k = cos_k_ref[...]
    sin_k = sin_k_ref[...]
    scale = 1.0 / float(np.sqrt(E))

    q_all = q_ref[0].astype(jnp.float32)    # (tl, H*E)
    k_all = k_ref[0].astype(jnp.float32)    # (ts, H*E)
    v_all = v_ref[0]                        # (ts, H*Dv) bf16

    for h in range(H):
        qh = q_all[:, h * E:(h + 1) * E]
        kh = k_all[:, h * E:(h + 1) * E]
        # Rotary (f32): x*cos + roll(x, E/2)*sin_signed == x*cos + rot_half(x)*sin
        qh = qh * cos_q + _rotated(qh, E // 2) * sin_q
        kh = kh * cos_k + _rotated(kh, E // 2) * sin_k
        # Scores via dot_general contracting last axes (no explicit transpose).
        s = jax.lax.dot_general(
            qh.astype(jnp.bfloat16), kh.astype(jnp.bfloat16),
            (((1,), (1,)), ((), ())),
            preferred_element_type=jnp.float32) * scale
        s = s + bias

        m_prev = m_scr[h]                                     # (tl, 1)
        m_new = jnp.maximum(m_prev, jnp.max(s, axis=-1, keepdims=True))
        alpha = jnp.exp(m_prev - m_new)
        p = jnp.exp(s - m_new)                                # (tl, ts) f32
        l_scr[h] = alpha * l_scr[h] + jnp.sum(p, axis=-1, keepdims=True)
        vh = v_all[:, h * Dv:(h + 1) * Dv]                    # (ts, Dv) bf16
        acc_scr[h] = alpha * acc_scr[h] + jnp.dot(
            p.astype(jnp.bfloat16), vh, preferred_element_type=jnp.float32)
        m_scr[h] = m_new

    @pl.when(si == pl.num_programs(2) - 1)
    def _():
        outs = []
        for h in range(H):
            inv_l = pl.reciprocal(l_scr[h], approx=True)      # EUP slot
            outs.append(acc_scr[h] * inv_l)
        o_ref[0] = jnp.concatenate(outs, axis=-1).astype(o_ref.dtype)


def pallas_attention(qp, kp, vp, cos_tab, sin_signed_tab, key_lens,
                     *, H, E, Dv):
    """qp: (N,L,H*E) bf16, kp: (N,S,H*E) bf16, vp: (N,S,H*Dv) bf16,
    cos_tab/sin_signed_tab: (max(L,S), E) f32, key_lens: (N,) int32
    -> (N, L, H*Dv) bf16."""
    N, L, _ = qp.shape
    S = kp.shape[1]
    tl = _pick_tile(L, 128)
    ts = _pick_tile(S, 512)
    grid = (N, L // tl, S // ts)
    kernel = functools.partial(_attention_kernel, H=H, E=E, Dv=Dv)
    return pl.pallas_call(
        kernel,
        out_shape=jax.ShapeDtypeStruct((N, L, H * Dv), jnp.bfloat16),
        grid_spec=pltpu.PrefetchScalarGridSpec(
            num_scalar_prefetch=1,
            grid=grid,
            in_specs=[
                pl.BlockSpec((1, tl, H * E), lambda n, li, si, kl: (n, li, 0)),
                pl.BlockSpec((1, ts, H * E), lambda n, li, si, kl: (n, si, 0)),
                pl.BlockSpec((1, ts, H * Dv), lambda n, li, si, kl: (n, si, 0)),
                pl.BlockSpec((tl, E), lambda n, li, si, kl: (li, 0)),
                pl.BlockSpec((tl, E), lambda n, li, si, kl: (li, 0)),
                pl.BlockSpec((ts, E), lambda n, li, si, kl: (si, 0)),
                pl.BlockSpec((ts, E), lambda n, li, si, kl: (si, 0)),
            ],
            out_specs=pl.BlockSpec((1, tl, H * Dv),
                                   lambda n, li, si, kl: (n, li, 0)),
            scratch_shapes=[
                pltpu.VMEM((H, tl, 1), jnp.float32),     # running max m
                pltpu.VMEM((H, tl, 1), jnp.float32),     # running sum l
                pltpu.VMEM((H, tl, Dv), jnp.float32),    # running acc
            ],
        ),
        compiler_params=pltpu.CompilerParams(
            dimension_semantics=("parallel", "parallel", "arbitrary"),
            vmem_limit_bytes=48 * 1024 * 1024),
    )(key_lens, qp, kp, vp, cos_tab, sin_signed_tab, cos_tab, sin_signed_tab)


# ----------------------------------------------------------------------------
# Glue (plain JAX): parameters, rotary tables, forward pass
# ----------------------------------------------------------------------------
def rotary_tables(num_pos, dim, base=10000.0):
    inv_freq = 1.0 / (base ** (jnp.arange(0, dim, 2, dtype=jnp.float32) / dim))
    t = jnp.arange(num_pos, dtype=jnp.float32)
    freqs = jnp.outer(t, inv_freq)                       # (P, dim/2)
    emb = jnp.concatenate([freqs, freqs], axis=-1)       # (P, dim)
    return jnp.cos(emb), jnp.sin(emb)


def init_params(key, d_model, n_heads, d_keys=None, d_values=None,
                d_model_keys=None):
    d_keys = d_keys or d_model // n_heads
    d_values = d_values or d_model // n_heads
    d_model_keys = d_model_keys or d_model

    def linear(k, din, dout):
        kw, kb = jax.random.split(k)
        bound = 1.0 / np.sqrt(din)
        w = jax.random.uniform(kw, (din, dout), jnp.float32, -bound, bound)
        b = jax.random.uniform(kb, (1, dout), jnp.float32, -bound, bound)
        return w, b

    kq, kk, kv, ko = jax.random.split(key, 4)
    wq, bq = linear(kq, d_model, d_keys * n_heads)
    wk, bk = linear(kk, d_model_keys, d_keys * n_heads)
    wv, bv = linear(kv, d_model_keys, d_values * n_heads)
    wo, bo = linear(ko, d_values * n_heads, d_model)
    return dict(wq=wq, bq=bq, wk=wk, bk=bk, wv=wv, bv=bv, wo=wo, bo=bo,
                n_heads=n_heads)


def relative_attention_layer(params, queries, keys, values,
                             query_lengths, key_lens):
    """Forward pass matching RelativeAttentionLayer.forward with a
    FullAttention inner attention and a causal attn_mask.
    key_lens: (N,) int32 valid key counts (key_lengths mask)."""
    # TODO(synk): query_lengths is accepted but (as in fast-transformers
    # FullAttention) unused; arbitrary non-causal attn_mask objects would need
    # an extra additive-mask input (causal is generated in-kernel).
    del query_lengths
    N, L, _ = queries.shape
    _, S, _ = keys.shape
    H = params["n_heads"]

    # TODO(synk): when queries/keys/values come from the same tensor the three
    # projections could be fused into a single (D, 3*H*E) matmul; the module
    # allows distinct sources so they stay separate (but tiled + pipelined).
    q = pallas_linear(queries.reshape(N * L, -1), params["wq"], params["bq"],
                      out_dtype=jnp.bfloat16)
    k = pallas_linear(keys.reshape(N * S, -1), params["wk"], params["bk"],
                      out_dtype=jnp.bfloat16)
    v = pallas_linear(values.reshape(N * S, -1), params["wv"], params["bv"],
                      out_dtype=jnp.bfloat16)

    E = q.shape[-1] // H
    Dv = v.shape[-1] // H
    assert E % 2 == 0, "rotary head dim must be even"
    qp = q.reshape(N, L, H * E)          # head-major layout, no transposes
    kp = k.reshape(N, S, H * E)
    vp = v.reshape(N, S, H * Dv)

    # Rotary tables (length max(L,S); equals the torch behaviour when S == L).
    cos, sin = rotary_tables(max(L, S), E)
    sin_signed = jnp.concatenate([-sin[:, :E // 2], sin[:, E // 2:]], axis=-1)

    attn = pallas_attention(qp, kp, vp, cos, sin_signed,
                            key_lens.astype(jnp.int32), H=H, E=E, Dv=Dv)
    y = pallas_linear(attn.reshape(N * L, H * Dv), params["wo"], params["bo"],
                      out_dtype=jnp.float32)
    return y.reshape(N, L, -1)


# ----------------------------------------------------------------------------
# Pure-JAX reference (mirrors the bf16-MXU / f32-accum precision choices)
# ----------------------------------------------------------------------------
def reference(params, queries, keys, values, key_lens):
    N, L, _ = queries.shape
    _, S, _ = keys.shape
    H = params["n_heads"]

    def lin(x, w, b):
        return jnp.dot(x.astype(jnp.bfloat16), w.astype(jnp.bfloat16),
                       preferred_element_type=jnp.float32) + b[0]

    q = lin(queries, params["wq"], params["bq"]).astype(jnp.bfloat16)
    k = lin(keys, params["wk"], params["bk"]).astype(jnp.bfloat16)
    v = lin(values, params["wv"], params["bv"]).astype(jnp.bfloat16)
    E = q.shape[-1] // H
    Dv = v.shape[-1] // H
    q = q.reshape(N, L, H, E).astype(jnp.float32)
    k = k.reshape(N, S, H, E).astype(jnp.float32)
    v = v.reshape(N, S, H, Dv)

    cos, sin = rotary_tables(max(L, S), E)

    def rot_half(x):
        return jnp.concatenate([-x[..., E // 2:], x[..., :E // 2]], axis=-1)

    q = q * cos[:L][None, :, None, :] + rot_half(q) * sin[:L][None, :, None, :]
    k = k * cos[:S][None, :, None, :] + rot_half(k) * sin[:S][None, :, None, :]

    scale = 1.0 / float(np.sqrt(E))
    scores = jnp.einsum("nlhe,nshe->nhls",
                        q.astype(jnp.bfloat16), k.astype(jnp.bfloat16),
                        preferred_element_type=jnp.float32) * scale
    q_pos = jnp.arange(L)[:, None]
    k_pos = jnp.arange(S)[None, :]
    keep = ((k_pos <= q_pos)[None, None] &
            (jnp.arange(S)[None, None, None, :] <
             key_lens[:, None, None, None]))
    scores = scores + jnp.where(keep, 0.0, NEG_INF)
    p = jax.nn.softmax(scores, axis=-1)
    out = jnp.einsum("nhls,nshd->nlhd", p.astype(jnp.bfloat16), v,
                     preferred_element_type=jnp.float32)
    out = out.astype(jnp.bfloat16).reshape(N, L, H * Dv)
    y = lin(out, params["wo"], params["bo"])
    return y


# ----------------------------------------------------------------------------
if __name__ == "__main__":
    N, L, S = 2, 8, 8            # rotary built from queries => L == S
    d_model, n_heads = 32, 4

    root = jax.random.PRNGKey(0)
    kp_, kq_, kk_, kv_ = jax.random.split(root, 4)
    params = init_params(kp_, d_model, n_heads)

    queries = jax.random.normal(kq_, (N, L, d_model), jnp.float32)
    keys = jax.random.normal(kk_, (N, S, d_model), jnp.float32)
    values = jax.random.normal(kv_, (N, S, d_model), jnp.float32)

    # key_lengths: per-sequence valid key counts (length mask)
    key_lens = jnp.array([8, 6], jnp.int32)
    # query_lengths: full (unused by FullAttention compute)
    query_lengths = jnp.ones((N, L), jnp.bool_)

    out = relative_attention_layer(params, queries, keys, values,
                                   query_lengths, key_lens)
    out = jax.block_until_ready(out)

    ref = reference(params, queries, keys, values, key_lens)
    # Tolerance covers bf16 MXU rounding differences between the online
    # softmax in the kernel and the direct softmax in the reference.
    np.testing.assert_allclose(np.asarray(out), np.asarray(ref),
                               rtol=1e-2, atol=1e-2)
    print("KERNEL_OK")
</pallas_src>

<mosaic_0001>
module attributes {stable_mosaic.version = 11 : i64} {
  func.func @_linear_kernel(%arg0: i32, %arg1: i32, %arg2: i32, %arg3: memref<16x32xf32, #tpu.memory_space<vmem>>, %arg4: memref<32x32xf32, #tpu.memory_space<vmem>>, %arg5: memref<1x32xf32, #tpu.memory_space<vmem>>, %arg6: memref<16x32xbf16, #tpu.memory_space<vmem>>, %arg7: memref<16x32xf32, #tpu.memory_space<vmem>>) attributes {dimension_semantics = [#tpu.dimension_semantics<parallel>, #tpu.dimension_semantics<parallel>, #tpu.dimension_semantics<arbitrary>], iteration_bounds = array<i64: 1, 1, 1>, scalar_prefetch = 0 : i64, scratch_operands = 1 : i64, tpu.core_type = #tpu.core_type<tc>, window_params = [{transform_indices = @transform_0, window_bounds = array<i64: 16, 32>}, {transform_indices = @transform_1, window_bounds = array<i64: 32, 32>}, {transform_indices = @transform_2, window_bounds = array<i64: 1, 32>}, {transform_indices = @transform_3, window_bounds = array<i64: 16, 32>}]} {
    %c0_i32 = arith.constant 0 : i32
    %0 = arith.cmpi eq, %arg2, %c0_i32 : i32
    %1 = arith.extui %0 : i1 to i32
    %c0_i32_0 = arith.constant 0 : i32
    %2 = arith.cmpi ne, %1, %c0_i32_0 : i32
    scf.if %2 {
      %cst_10 = arith.constant 0.000000e+00 : f32
      %14 = vector.broadcast %cst_10 : f32 to vector<16x32xf32>
      %c0_11 = arith.constant 0 : index
      %c0_12 = arith.constant 0 : index
      %15 = vector.load %arg7[%c0_11, %c0_12] : memref<16x32xf32, #tpu.memory_space<vmem>>, vector<16x32xf32>
      tpu.vector_store %arg7[%c0_11, %c0_12], %14 {strides = array<i32>} : memref<16x32xf32, #tpu.memory_space<vmem>>, vector<16x32xf32>,
    } else {
    }
    %c0 = arith.constant 0 : index
    %c0_1 = arith.constant 0 : index
    %3 = vector.load %arg7[%c0, %c0_1] : memref<16x32xf32, #tpu.memory_space<vmem>>, vector<16x32xf32>
    %c0_2 = arith.constant 0 : index
    %c0_3 = arith.constant 0 : index
    %4 = vector.load %arg3[%c0_2, %c0_3] : memref<16x32xf32, #tpu.memory_space<vmem>>, vector<16x32xf32>
    %5 = arith.truncf %4 : vector<16x32xf32> to vector<16x32xbf16>
    %c0_4 = arith.constant 0 : index
    %c0_5 = arith.constant 0 : index
    %6 = vector.load %arg4[%c0_4, %c0_5] : memref<32x32xf32, #tpu.memory_space<vmem>>, vector<32x32xf32>
    %7 = arith.truncf %6 : vector<32x32xf32> to vector<32x32xbf16>
    %cst = arith.constant dense<0.000000e+00> : vector<16x32xf32>
    %8 = tpu.matmul %5, %7, %cst {dimension_numbers = #tpu.dot_dimension_numbers<[1], [0], [0], [1], [0, 0, 1, 1], [], []>} : vector<16x32xbf16>, vector<32x32xbf16>, vector<16x32xf32> -> vector<16x32xf32>
    %9 = arith.addf %3, %8 : vector<16x32xf32>
    %c0_6 = arith.constant 0 : index
    %c0_7 = arith.constant 0 : index
    %10 = vector.load %arg7[%c0_6, %c0_7] : memref<16x32xf32, #tpu.memory_space<vmem>>, vector<16x32xf32>
    tpu.vector_store %arg7[%c0_6, %c0_7], %9 {strides = array<i32>} : memref<16x32xf32, #tpu.memory_space<vmem>>, vector<16x32xf32>,
    %c0_i32_8 = arith.constant 0 : i32
    %11 = arith.cmpi eq, %arg2, %c0_i32_8 : i32
    %12 = arith.extui %11 : i1 to i32
    %c0_i32_9 = arith.constant 0 : i32
    %13 = arith.cmpi ne, %12, %c0_i32_9 : i32
    scf.if %13 {
      %c0_10 = arith.constant 0 : index
      %c0_11 = arith.constant 0 : index
      %14 = vector.load %arg7[%c0_10, %c0_11] : memref<16x32xf32, #tpu.memory_space<vmem>>, vector<16x32xf32>
      %c0_12 = arith.constant 0 : index
      %c0_13 = arith.constant 0 : index
      %15 = vector.load %arg5[%c0_12, %c0_13] : memref<1x32xf32, #tpu.memory_space<vmem>>, vector<1x32xf32>
      %16 = vector.broadcast %15 : vector<1x32xf32> to vector<16x32xf32>
      %17 = arith.addf %14, %16 : vector<16x32xf32>
      %18 = arith.truncf %17 : vector<16x32xf32> to vector<16x32xbf16>
      %c0_14 = arith.constant 0 : index
      %c0_15 = arith.constant 0 : index
      %19 = vector.load %arg6[%c0_14, %c0_15] : memref<16x32xbf16, #tpu.memory_space<vmem>>, vector<16x32xbf16>
      tpu.vector_store %arg6[%c0_14, %c0_15], %18 {strides = array<i32>} : memref<16x32xbf16, #tpu.memory_space<vmem>>, vector<16x32xbf16>,
    } else {
    }
    return
  }
  func.func @transform_0(%arg0: i32, %arg1: i32, %arg2: i32) -> (i32, i32) {
    %c0_i32 = arith.constant 0 : i32
    return %arg0, %arg2 : i32, i32
  }
  func.func @transform_1(%arg0: i32, %arg1: i32, %arg2: i32) -> (i32, i32) {
    %c0_i32 = arith.constant 0 : i32
    return %arg2, %arg1 : i32, i32
  }
  func.func @transform_2(%arg0: i32, %arg1: i32, %arg2: i32) -> (i32, i32) {
    %c0_i32 = arith.constant 0 : i32
    %c0_i32_0 = arith.constant 0 : i32
    return %c0_i32, %arg1 : i32, i32
  }
  func.func @transform_3(%arg0: i32, %arg1: i32, %arg2: i32) -> (i32, i32) {
    %c0_i32 = arith.constant 0 : i32
    return %arg0, %arg1 : i32, i32
  }
}

</mosaic_0001>

<llo_original>
// kernel: tpu_custom_call.1
$region0: #{tpu_custom_call.1}
  #allocation0 [shape = 'u32[]', space=smem, size = 0x4, offset = 0x4, fixed_abs, tag = 'smem constant byte address 0x4 - core index']
  #allocation1 [shape = 'u32[144,128]{1,0:T(1,128)}', space=vmem, size = 0x12000, scoped, tag = 'internal scratch']
  #allocation2 [shape = 'f32[16,32]{1,0:T(8,128)}', space=vmem, size = 0x2000, scoped, tag = 'scratch operand']
  %s0 = inlined_call_operand.hbm [shape: f32[16,32], index: 0, kind: input, shape index: {}]
  %s1 = inlined_call_operand.hbm [shape: f32[32,32], index: 1, kind: input, shape index: {}]
  %s2 = inlined_call_operand.vmem [shape: f32[1,32], index: 2, kind: input, shape index: {}]
  %s3 = inlined_call_operand.hbm [shape: bf16[16,32], index: 3, kind: output, shape index: {}]
  %s4 = sld [smem:[#allocation0]]
  $region38: #{tpu_custom_call.1} parent=0
    _
  %s6 = ssub.s32 1, %s4
  %s7 = scalar_select 0, %s6, %s4
  $region1: #{tpu_custom_call.1} parent=0
    #allocation3 [shape = 'u8[8192]{0}', space=vmem, size = 0x2000, scoped, tag = 'input window, operand 0, single buffered']
    #allocation4 [shape = 's32[1]{0}', space=sflag, size = 0x4, scoped, tag = 'scoped memory for tpu_custom_call.1']
    #allocation5 [shape = 's32[1]{0}', space=sflag, size = 0x4, scoped, tag = 'scoped memory for tpu_custom_call.1']
    #allocation6 [shape = 'u8[16384]{0}', space=vmem, size = 0x4000, scoped, tag = 'input window, operand 1, single buffered']
    #allocation7 [shape = 's32[1]{0}', space=sflag, size = 0x4, scoped, tag = 'scoped memory for tpu_custom_call.1']
    #allocation8 [shape = 'u8[4096]{0}', space=vmem, size = 0x1000, scoped, tag = 'output window, operand 0, single buffered']
    %8 = vsyncpa [#allocation4], 0
    %9 = vsyncpa [#allocation7], 0
    %10 = vsyncpa [#allocation5], 0
    // Predicated region
    $region2: #{tpu_custom_call.1} parent=1 // pred_check
      _
    $region3: #{tpu_custom_call.1} parent=1 // pred_check_branch
      %12 = sbr.rel (0) target = $region5
    $region4: #{tpu_custom_call.1} parent=1 // pred_region
      %s14 = ssub.s32 256, 256
      %15 = vsyncadd [#allocation4], %s14
      %s16 = sshll.u32 [#allocation3], 4
      %s17 = int_to_ptr.vmem [resolvable:$true] %s16
      %22 = dma.hbm_to_vmem [thread:$0]  %s0, 256, %s17, [#allocation4], 128, 128, 8
    $region5: #{tpu_custom_call.1} parent=1 // pred_fallthru
      _
    // Predicated region
    $region6: #{tpu_custom_call.1} parent=1 // pred_check
      _
    $region7: #{tpu_custom_call.1} parent=1 // pred_check_branch
      %24 = sbr.rel (0) target = $region9
    $region8: #{tpu_custom_call.1} parent=1 // pred_region
      %s26 = ssub.s32 512, 512
      %27 = vsyncadd [#allocation7], %s26
      %s28 = sshll.u32 [#allocation6], 4
      %s29 = int_to_ptr.vmem [resolvable:$true] %s28
      %34 = dma.hbm_to_vmem [thread:$0]  %s1, 512, %s29, [#allocation7], 128, 128, 8
    $region9: #{tpu_custom_call.1} parent=1 // pred_fallthru
      _
    // Predicated region
    $region10: #{tpu_custom_call.1} parent=1 // pred_check
      _
    $region11: #{tpu_custom_call.1} parent=1 // pred_check_branch
      %36 = sbr.rel (0) target = $region13
    $region12: #{tpu_custom_call.1} parent=1 // pred_region
      _
    $region13: #{tpu_custom_call.1} parent=1 // pred_fallthru
      _
    // Predicated region
    $region14: #{tpu_custom_call.1} parent=1 // pred_check
      _
    $region15: #{tpu_custom_call.1} parent=1 // pred_check_branch
      %38 = sbr.rel (0) target = $region17
    $region16: #{tpu_custom_call.1} parent=1 // pred_region
      %39 = dma.done [#allocation4], 256
    $region17: #{tpu_custom_call.1} parent=1 // pred_fallthru
      _
    // Predicated region
    $region18: #{tpu_custom_call.1} parent=1 // pred_check
      _
    $region19: #{tpu_custom_call.1} parent=1 // pred_check_branch
      %41 = sbr.rel (0) target = $region21
    $region20: #{tpu_custom_call.1} parent=1 // pred_region
      %42 = dma.done [#allocation7], 512
    $region21: #{tpu_custom_call.1} parent=1 // pred_fallthru
      _
    %p44 = scmp.eq.s32.totalorder 0, 0
    // Predicated region
    $region22: #{tpu_custom_call.1} parent=1 // pred_check
      %p45 = pneg %p44
    $region23: #{tpu_custom_call.1} parent=1 // pred_check_branch
      %47 = sbr.rel (%p45) target = $region25
    $region24: #{tpu_custom_call.1} parent=1 // pred_region
      %vm48 = vcmask 261120
      %49 = vst.msk [vmem:[#allocation2] sm:$0xff] %vm48, 0.0
      %50 = vst.msk [vmem:[#allocation2 + $0x8] sm:$0xff] %vm48, 0.0
    $region25: #{tpu_custom_call.1} parent=1 // pred_fallthru
      _
    %v51 = vld [vmem:[#allocation2] sm:$0xff]
    %v52 = vld [vmem:[#allocation2 + $0x8] sm:$0xff]
    %v53 = vld [vmem:[#allocation3] sm:$0xff]
    %v54 = vld [vmem:[#allocation3 + $0x8] sm:$0xff]
    %v55 = vpack.c.bf16 %v54, %v53
    %v56 = vld [vmem:[#allocation6] sm:$0xff]
    %v57 = vld [vmem:[#allocation6 + $0x8] sm:$0xff]
    %v58 = vld [vmem:[#allocation6 + $0x10] sm:$0xff]
    %v59 = vld [vmem:[#allocation6 + $0x18] sm:$0xff]
    %v60 = vpack.c.bf16 %v57, %v56
    %v61 = vpack.c.bf16 %v59, %v58
    %vm62 = vcmask 261120
    %v64 = vsel %vm62, %v55, 0
    %66 = vmatprep.subr.bf16.mxu0 0
    %67 = vmatpush1.bf16.msra.mxu0 %v60
    %68 = vmatprep.subr.bf16.mxu0 0
    %69 = vmatpush1.bf16.msra.mxu0 %v61
    %70 = vmatprep.subr.bf16.mxu0 0
    %71 = vmatpush1.bf16.msra.mxu0 0
    %72 = vmatprep.subr.bf16.mxu0 0
    %73 = vmatpush1.bf16.msra.mxu0 0
    %74 = vmatprep.subr.bf16.mxu0 0
    %75 = vmatpush1.bf16.msra.mxu0 0
    %76 = vmatprep.subr.bf16.mxu0 0
    %77 = vmatpush1.bf16.msra.mxu0 0
    %78 = vmatprep.subr.bf16.mxu0 0
    %79 = vmatpush1.bf16.msra.mxu0 0
    %80 = vmatprep.subr.bf16.mxu0 0
    %81 = vmatpush1.bf16.msra.mxu0 0
    %82 = vmatprep.subr.bf16.mxu0 0
    %83 = vmatpush1.bf16.msra.mxu0 0
    %84 = vmatprep.subr.bf16.mxu0 0
    %85 = vmatpush1.bf16.msra.mxu0 0
    %86 = vmatprep.subr.bf16.mxu0 0
    %87 = vmatpush1.bf16.msra.mxu0 0
    %88 = vmatprep.subr.bf16.mxu0 0
    %89 = vmatpush1.bf16.msra.mxu0 0
    %90 = vmatprep.subr.bf16.mxu0 0
    %91 = vmatpush1.bf16.msra.mxu0 0
    %92 = vmatprep.subr.bf16.mxu0 0
    %93 = vmatpush1.bf16.msra.mxu0 0
    %94 = vmatprep.subr.bf16.mxu0 0
    %95 = vmatpush1.bf16.msra.mxu0 0
    %96 = vmatprep.subr.bf16.mxu0 0
    %97 = vmatpush1.bf16.msra.mxu0 0
    %98 = vmatprep.mubr.bf16.mxu0 0
    %99 = vmatmul.mubr.bf16.gmra.mrb[0].mxu0 %v64
    %v100 = vpop.f32.mrb[0].mxu0
    %v101 = vadd.f32 0.0, %v100
    %v102 = vpop.f32.mrb[0].mxu0
    %v103 = vpop.f32.mrb[0].mxu0
    %v104 = vadd.f32 0.0, %v103
    %v105 = vpop.f32.mrb[0].mxu0
    %106 = vdwg.mxu0
    %v107 = vadd.f32 %v51, %v101
    %v108 = vadd.f32 %v52, %v104
    %109 = vst.msk [vmem:[#allocation2] sm:$0xff] %vm62, %v107
    %110 = vst.msk [vmem:[#allocation2 + $0x8] sm:$0xff] %vm62, %v108
    // Predicated region
    $region26: #{tpu_custom_call.1} parent=1 // pred_check
      %p111 = pneg %p44
    $region27: #{tpu_custom_call.1} parent=1 // pred_check_branch
      %113 = sbr.rel (%p111) target = $region29
    $region28: #{tpu_custom_call.1} parent=1 // pred_region
      %v114 = vld [vmem:[#allocation2] sm:$0xff]
      %v115 = vld [vmem:[#allocation2 + $0x8] sm:$0xff]
      %v116 = vld [vmem:[%s2] sm:$0x1]
      %v118 = vlaneseq
      %v119 = vshrl.u32 %v118, 7
      %v120 = vsub.s32 0, %v119
      %v121 = vrot.slane %v116, %v120
      %v123 = vadd.f32 %v114, %v121
      %v124 = vadd.f32 %v115, %v121
      %v125 = vpack.c.bf16 %v124, %v123
      %v127 = vunpack.c.l.b16 %v125
      %v128 = vunpack.c.h.b16 %v125
      %v129 = vpack.c.b16 %v127, %v127
      %v130 = vpack.c.b16 %v128, %v128
      %vm133 = vcmask 257024
      %134 = vst.msk [vmem:[#allocation8] sm:$0xf] %vm133, %v129
      %135 = vst.msk [vmem:[#allocation8 + $0x4] sm:$0xf] %vm133, %v130
    $region29: #{tpu_custom_call.1} parent=1 // pred_fallthru
      _
    // Predicated region
    $region30: #{tpu_custom_call.1} parent=1 // pred_check
      _
    $region31: #{tpu_custom_call.1} parent=1 // pred_check_branch
      %137 = sbr.rel (0) target = $region33
    $region32: #{tpu_custom_call.1} parent=1 // pred_region
      %s139 = ssub.s32 128, 128
      %140 = vsyncadd [#allocation5], %s139
      %s141 = sshll.u32 [#allocation8], 4
      %s142 = int_to_ptr.vmem [resolvable:$true] %s141
      %147 = dma.vmem_to_hbm [thread:$0]  %s142, 128, %s3, [#allocation5], 64, 64, 4
    $region33: #{tpu_custom_call.1} parent=1 // pred_fallthru
      _
    // Predicated region
    $region34: #{tpu_custom_call.1} parent=1 // pred_check
      _
    $region35: #{tpu_custom_call.1} parent=1 // pred_check_branch
      %149 = sbr.rel (0) target = $region37
    $region36: #{tpu_custom_call.1} parent=1 // pred_region
      %150 = dma.done [#allocation5], 128
    $region37: #{tpu_custom_call.1} parent=1 // pred_fallthru
      _
    %151 = vsyncpa [#allocation4], 1
    %152 = vsyncpa [#allocation7], 1
    %153 = vsyncpa [#allocation5], 1

</llo_original>
